<compile_context>
chip_gen: v7x
topology: tpu7x:2x2x1
jax: 0.10.0
libtpu: 0.0.40
codegen_flags: <defaults>
</compile_context>

<pallas_src>
import jax
import jax.numpy as jnp
from jax.experimental import pallas as pl
from jax.experimental.pallas import tpu as pltpu


def scse_kernel(x_ref, w1t_ref, b1_ref, w2_ref, b2_ref, wspc_ref, out_ref):
    # x_ref block: (Nb, C, HW) in its storage dtype (f32 or bf16).
    x = x_ref[...]                                                            # (Nb, C, HW)

    # ---- channel SE path (VPU mul + XLU reductions; matmuls are degenerate, skip MXU) ----
    # AdaptiveAvgPool2d(1): accumulate the lane reduction in f32.
    pooled = jnp.mean(x, axis=2, keepdims=True, dtype=jnp.float32)            # (Nb, C, 1)
    # layer 1: h[n, m] = sum_c W1[m, c] * pooled[n, c] + b1[m]   (W1 passed transposed, (C, mid))
    w1t = w1t_ref[...].astype(jnp.float32)                                    # (C, mid)
    h = jnp.sum(pooled * w1t[None], axis=1)                                   # (Nb, mid)
    h = jnp.maximum(h + b1_ref[...].astype(jnp.float32), 0.0)                 # ReLU
    # layer 2: c[n, k] = sum_m W2[k, m] * h[n, m] + b2[k]
    w2 = w2_ref[...].astype(jnp.float32)                                      # (C, mid)
    c = jnp.sum(w2[None] * h[:, None, :], axis=2, keepdims=True)              # (Nb, C, 1)
    c = c + b2_ref[...].astype(jnp.float32)[None]
    chn_se = jnp.exp(jax.nn.sigmoid(c))                                       # (Nb, C, 1)

    # ---- spatial SE path (1x1 conv, no bias): storage-dtype mul, f32 sublane reduce ----
    wspc = wspc_ref[...].astype(x.dtype)                                      # (C, 1)
    s = jnp.sum(x * wspc[None], axis=1, keepdims=True, dtype=jnp.float32)     # (Nb, 1, HW)
    spa_se = jnp.exp(jax.nn.sigmoid(s))                                       # (Nb, 1, HW)

    # ---- combine (chn_se broadcasts over lanes, spa_se over sublanes) ----
    if x.dtype == jnp.bfloat16:
        out = x * chn_se.astype(jnp.bfloat16) * spa_se.astype(jnp.bfloat16)   # bf16 VALU
    else:
        out = x.astype(jnp.float32) * chn_se * spa_se
    out_ref[...] = out.astype(out_ref.dtype)


def _pipeline_config(N, C, HW, itemsize):
    """Pick batch-block step count and VMEM limit based on TPU generation."""
    try:
        kind = jax.devices()[0].device_kind.lower()
    except Exception:  # pragma: no cover - defensive, default to single-TC config
        kind = ""
    is_v7x = "v7" in kind
    # Budget (bytes) we allow the double-buffered x + out pipeline to use.
    budget = (40 << 20) if is_v7x else (80 << 20)
    want = 2 if is_v7x else 1  # v7x: one parallel step per TensorCore; v5e/v6e: 1 step.

    def pipe_bytes(nb):
        return 2 * 2 * nb * C * HW * itemsize  # x + out, double-buffered

    steps = min(want, N) if N > 0 else 1
    while steps < N and (N % steps != 0 or pipe_bytes(N // steps) > budget):
        steps += 1
    if N % steps != 0:
        steps = N  # fallback: one batch element per step

    nb = N // steps
    cap = (56 << 20) if is_v7x else (100 << 20)
    vmem_limit = min(cap, max(32 << 20, int(pipe_bytes(nb) * 1.25) + (1 << 20)))
    return steps, nb, vmem_limit


@jax.jit
def scse_block(x, w1, b1, w2, b2, wsp):
    """x: (N, C, H, W); w1: (mid, C); b1: (mid,); w2: (C, mid); b2: (C,); wsp: (1, C)."""
    N, C, H, W = x.shape
    HW = H * W
    mid = w1.shape[0]
    itemsize = jnp.dtype(x.dtype).itemsize
    xr = x.reshape(N, C, HW)

    n_steps, nb, vmem_limit = _pipeline_config(N, C, HW, itemsize)

    cost = pl.CostEstimate(
        flops=int(4 * N * C * HW),
        transcendentals=int(2 * N * (C + HW)),
        bytes_accessed=int(2 * N * C * HW * itemsize + (2 * C * mid + mid + 2 * C) * 4),
    )

    out = pl.pallas_call(
        scse_kernel,
        out_shape=jax.ShapeDtypeStruct((N, C, HW), x.dtype),
        grid_spec=pltpu.PrefetchScalarGridSpec(
            num_scalar_prefetch=0,
            grid=(n_steps,),
            in_specs=[
                # x: nb batch elements per step.
                pl.BlockSpec((nb, C, HW), lambda n: (n, 0, 0)),
                pl.BlockSpec((C, mid), lambda n: (0, 0)),   # W1^T  (C, mid)
                pl.BlockSpec((1, mid), lambda n: (0, 0)),   # b1    (1, mid) lane-dense
                pl.BlockSpec((C, mid), lambda n: (0, 0)),   # W2    (C, mid)
                pl.BlockSpec((C, 1), lambda n: (0, 0)),     # b2    (C, 1) column
                pl.BlockSpec((C, 1), lambda n: (0, 0)),     # Wsp^T (C, 1) column
            ],
            out_specs=pl.BlockSpec((nb, C, HW), lambda n: (n, 0, 0)),
        ),
        compiler_params=pltpu.CompilerParams(
            dimension_semantics=("parallel",),   # shards batch steps across v7x's 2 TCs
            vmem_limit_bytes=vmem_limit,
        ),
        cost_estimate=cost,
    )(xr, w1.T, b1.reshape(1, mid), w2, b2.reshape(C, 1), wsp.T)

    return out.reshape(N, C, H, W)


def scse_reference(x, w1, b1, w2, b2, wsp):
    """Plain-JAX reference mirroring the PyTorch forward."""
    pooled = x.mean(axis=(2, 3))                              # (N, C)
    h = jnp.maximum(pooled @ w1.T + b1, 0.0)                  # (N, mid)
    c = jax.nn.sigmoid(h @ w2.T + b2)                         # (N, C)
    chn_se = jnp.exp(c)[:, :, None, None]                     # (N, C, 1, 1)
    s = jnp.einsum("nchw,oc->nohw", x, wsp)                   # (N, 1, H, W)
    spa_se = jnp.exp(jax.nn.sigmoid(s))
    return x * chn_se * spa_se


if __name__ == "__main__":
    # channel=32, reduct_ratio=16 -> mid channels = 2
    N, C, H, W = 2, 32, 16, 16
    RATIO = 16
    MID = C // RATIO

    key = jax.random.PRNGKey(0)
    kx, k1, k2, k3, k4, k5 = jax.random.split(key, 6)

    x = jax.random.normal(kx, (N, C, H, W), dtype=jnp.float32)
    # 1x1 convs == per-pixel linears; weights initialized deterministically.
    w1 = jax.random.normal(k1, (MID, C), dtype=jnp.float32) * 0.2   # linear1.weight
    b1 = jax.random.normal(k2, (MID,), dtype=jnp.float32) * 0.1     # linear1.bias
    w2 = jax.random.normal(k3, (C, MID), dtype=jnp.float32) * 0.2   # linear2.weight
    b2 = jax.random.normal(k4, (C,), dtype=jnp.float32) * 0.1       # linear2.bias
    wsp = jax.random.normal(k5, (1, C), dtype=jnp.float32) * 0.2    # spatial conv weight

    # Reference first (independent of any buffer reuse in the kernel path).
    ref = scse_reference(x, w1, b1, w2, b2, wsp)

    out = scse_block(x, w1, b1, w2, b2, wsp)
    out = jax.block_until_ready(out)

    assert out.shape == (N, C, H, W)
    assert jnp.allclose(out, ref, rtol=2e-5, atol=2e-5), "mismatch vs reference"

    print("KERNEL_OK")
</pallas_src>

<mosaic_0001>
module attributes {stable_mosaic.version = 11 : i64} {
  func.func @scse_kernel(%arg0: i32, %arg1: memref<2x32x256xf32, #tpu.memory_space<vmem>>, %arg2: memref<32x2xf32, #tpu.memory_space<vmem>>, %arg3: memref<1x2xf32, #tpu.memory_space<vmem>>, %arg4: memref<32x2xf32, #tpu.memory_space<vmem>>, %arg5: memref<32x1xf32, #tpu.memory_space<vmem>>, %arg6: memref<32x1xf32, #tpu.memory_space<vmem>>, %arg7: memref<2x32x256xf32, #tpu.memory_space<vmem>>) attributes {dimension_semantics = [#tpu.dimension_semantics<parallel>], iteration_bounds = array<i64: 1>, scalar_prefetch = 0 : i64, scratch_operands = 0 : i64, tpu.core_type = #tpu.core_type<tc>, window_params = [{transform_indices = @transform_0, window_bounds = array<i64: 2, 32, 256>}, {pipeline_mode = #tpu.pipeline_mode<synchronous>, transform_indices = @transform_1, window_bounds = array<i64: 32, 2>}, {pipeline_mode = #tpu.pipeline_mode<synchronous>, transform_indices = @transform_2, window_bounds = array<i64: 1, 2>}, {pipeline_mode = #tpu.pipeline_mode<synchronous>, transform_indices = @transform_3, window_bounds = array<i64: 32, 2>}, {pipeline_mode = #tpu.pipeline_mode<synchronous>, transform_indices = @transform_4, window_bounds = array<i64: 32, 1>}, {pipeline_mode = #tpu.pipeline_mode<synchronous>, transform_indices = @transform_5, window_bounds = array<i64: 32, 1>}, {transform_indices = @transform_6, window_bounds = array<i64: 2, 32, 256>}]} {
    %c0 = arith.constant 0 : index
    %c0_0 = arith.constant 0 : index
    %c0_1 = arith.constant 0 : index
    %0 = vector.load %arg1[%c0, %c0_0, %c0_1] : memref<2x32x256xf32, #tpu.memory_space<vmem>>, vector<2x32x256xf32>
    %cst = arith.constant dense<0.000000e+00> : vector<2x32xf32>
    %1 = vector.multi_reduction <add>, %0, %cst [2] : vector<2x32x256xf32> to vector<2x32xf32>
    %2 = vector.shape_cast %1 : vector<2x32xf32> to vector<2x32x1xf32>
    %cst_2 = arith.constant 2.560000e+02 : f32
    %3 = vector.broadcast %cst_2 : f32 to vector<2x32x1xf32>
    %4 = arith.divf %2, %3 : vector<2x32x1xf32>
    %c0_3 = arith.constant 0 : index
    %c0_4 = arith.constant 0 : index
    %5 = vector.load %arg2[%c0_3, %c0_4] : memref<32x2xf32, #tpu.memory_space<vmem>>, vector<32x2xf32>
    %6 = vector.shape_cast %5 : vector<32x2xf32> to vector<1x32x2xf32>
    %7 = vector.broadcast %4 : vector<2x32x1xf32> to vector<2x32x2xf32>
    %8 = vector.broadcast %6 : vector<1x32x2xf32> to vector<2x32x2xf32>
    %9 = arith.mulf %7, %8 : vector<2x32x2xf32>
    %cst_5 = arith.constant dense<0.000000e+00> : vector<2x2xf32>
    %10 = vector.multi_reduction <add>, %9, %cst_5 [1] : vector<2x32x2xf32> to vector<2x2xf32>
    %c0_6 = arith.constant 0 : index
    %c0_7 = arith.constant 0 : index
    %11 = vector.load %arg3[%c0_6, %c0_7] : memref<1x2xf32, #tpu.memory_space<vmem>>, vector<1x2xf32>
    %12 = vector.broadcast %11 : vector<1x2xf32> to vector<2x2xf32>
    %13 = arith.addf %10, %12 : vector<2x2xf32>
    %cst_8 = arith.constant 0.000000e+00 : f32
    %14 = vector.broadcast %cst_8 : f32 to vector<2x2xf32>
    %15 = arith.maximumf %13, %14 : vector<2x2xf32>
    %c0_9 = arith.constant 0 : index
    %c0_10 = arith.constant 0 : index
    %16 = vector.load %arg4[%c0_9, %c0_10] : memref<32x2xf32, #tpu.memory_space<vmem>>, vector<32x2xf32>
    %17 = vector.shape_cast %16 : vector<32x2xf32> to vector<1x32x2xf32>
    %18 = vector.shape_cast %15 : vector<2x2xf32> to vector<2x1x2xf32>
    %19 = vector.broadcast %17 : vector<1x32x2xf32> to vector<2x32x2xf32>
    %20 = vector.broadcast %18 : vector<2x1x2xf32> to vector<2x32x2xf32>
    %21 = arith.mulf %19, %20 : vector<2x32x2xf32>
    %cst_11 = arith.constant dense<0.000000e+00> : vector<2x32xf32>
    %22 = vector.multi_reduction <add>, %21, %cst_11 [2] : vector<2x32x2xf32> to vector<2x32xf32>
    %23 = vector.shape_cast %22 : vector<2x32xf32> to vector<2x32x1xf32>
    %c0_12 = arith.constant 0 : index
    %c0_13 = arith.constant 0 : index
    %24 = vector.load %arg5[%c0_12, %c0_13] : memref<32x1xf32, #tpu.memory_space<vmem>>, vector<32x1xf32>
    %25 = vector.shape_cast %24 : vector<32x1xf32> to vector<1x32x1xf32>
    %26 = vector.broadcast %25 : vector<1x32x1xf32> to vector<2x32x1xf32>
    %27 = arith.addf %23, %26 : vector<2x32x1xf32>
    %28 = arith.negf %27 : vector<2x32x1xf32>
    %29 = math.exp %28 : vector<2x32x1xf32>
    %cst_14 = arith.constant 1.000000e+00 : f32
    %30 = vector.broadcast %cst_14 : f32 to vector<2x32x1xf32>
    %31 = arith.addf %30, %29 : vector<2x32x1xf32>
    %32 = arith.divf %30, %31 : vector<2x32x1xf32>
    %33 = math.exp %32 : vector<2x32x1xf32>
    %c0_15 = arith.constant 0 : index
    %c0_16 = arith.constant 0 : index
    %34 = vector.load %arg6[%c0_15, %c0_16] : memref<32x1xf32, #tpu.memory_space<vmem>>, vector<32x1xf32>
    %35 = vector.shape_cast %34 : vector<32x1xf32> to vector<1x32x1xf32>
    %36 = vector.broadcast %35 : vector<1x32x1xf32> to vector<2x32x256xf32>
    %37 = arith.mulf %0, %36 : vector<2x32x256xf32>
    %cst_17 = arith.constant dense<0.000000e+00> : vector<2x256xf32>
    %38 = vector.multi_reduction <add>, %37, %cst_17 [1] : vector<2x32x256xf32> to vector<2x256xf32>
    %39 = vector.shape_cast %38 : vector<2x256xf32> to vector<2x1x256xf32>
    %40 = arith.negf %39 : vector<2x1x256xf32>
    %41 = math.exp %40 : vector<2x1x256xf32>
    %cst_18 = arith.constant 1.000000e+00 : f32
    %42 = vector.broadcast %cst_18 : f32 to vector<2x1x256xf32>
    %43 = arith.addf %42, %41 : vector<2x1x256xf32>
    %44 = arith.divf %42, %43 : vector<2x1x256xf32>
    %45 = math.exp %44 : vector<2x1x256xf32>
    %46 = vector.broadcast %33 : vector<2x32x1xf32> to vector<2x32x256xf32>
    %47 = arith.mulf %0, %46 : vector<2x32x256xf32>
    %48 = vector.broadcast %45 : vector<2x1x256xf32> to vector<2x32x256xf32>
    %49 = arith.mulf %47, %48 : vector<2x32x256xf32>
    %c0_19 = arith.constant 0 : index
    %c0_20 = arith.constant 0 : index
    %c0_21 = arith.constant 0 : index
    %50 = vector.load %arg7[%c0_19, %c0_20, %c0_21] : memref<2x32x256xf32, #tpu.memory_space<vmem>>, vector<2x32x256xf32>
    tpu.vector_store %arg7[%c0_19, %c0_20, %c0_21], %49 {strides = array<i32>} : memref<2x32x256xf32, #tpu.memory_space<vmem>>, vector<2x32x256xf32>,
    return
  }
  func.func @transform_0(%arg0: i32) -> (i32, i32, i32) {
    %c0_i32 = arith.constant 0 : i32
    %c0_i32_0 = arith.constant 0 : i32
    %c0_i32_1 = arith.constant 0 : i32
    return %arg0, %c0_i32, %c0_i32_0 : i32, i32, i32
  }
  func.func @transform_1(%arg0: i32) -> (i32, i32) {
    %c0_i32 = arith.constant 0 : i32
    %c0_i32_0 = arith.constant 0 : i32
    %c0_i32_1 = arith.constant 0 : i32
    return %c0_i32, %c0_i32_0 : i32, i32
  }
  func.func @transform_2(%arg0: i32) -> (i32, i32) {
    %c0_i32 = arith.constant 0 : i32
    %c0_i32_0 = arith.constant 0 : i32
    %c0_i32_1 = arith.constant 0 : i32
    return %c0_i32, %c0_i32_0 : i32, i32
  }
  func.func @transform_3(%arg0: i32) -> (i32, i32) {
    %c0_i32 = arith.constant 0 : i32
    %c0_i32_0 = arith.constant 0 : i32
    %c0_i32_1 = arith.constant 0 : i32
    return %c0_i32, %c0_i32_0 : i32, i32
  }
  func.func @transform_4(%arg0: i32) -> (i32, i32) {
    %c0_i32 = arith.constant 0 : i32
    %c0_i32_0 = arith.constant 0 : i32
    %c0_i32_1 = arith.constant 0 : i32
    return %c0_i32, %c0_i32_0 : i32, i32
  }
  func.func @transform_5(%arg0: i32) -> (i32, i32) {
    %c0_i32 = arith.constant 0 : i32
    %c0_i32_0 = arith.constant 0 : i32
    %c0_i32_1 = arith.constant 0 : i32
    return %c0_i32, %c0_i32_0 : i32, i32
  }
  func.func @transform_6(%arg0: i32) -> (i32, i32, i32) {
    %c0_i32 = arith.constant 0 : i32
    %c0_i32_0 = arith.constant 0 : i32
    %c0_i32_1 = arith.constant 0 : i32
    return %arg0, %c0_i32, %c0_i32_0 : i32, i32, i32
  }
}

</mosaic_0001>

<llo_original>
// kernel: scse_block.1
$region0: #{scse_block.1}
  #allocation0 [shape = 'u32[]', space=smem, size = 0x4, offset = 0x4, fixed_abs, tag = 'smem constant byte address 0x4 - core index']
  #allocation1 [shape = 'u32[144,128]{1,0:T(1,128)}', space=vmem, size = 0x12000, scoped, tag = 'internal scratch']
  %s0 = inlined_call_operand.vmem [shape: f32[2,32,256], index: 0, kind: input, shape index: {}]
  %s1 = inlined_call_operand.vmem [shape: f32[32,2], index: 1, kind: input, shape index: {}]
  %s2 = inlined_call_operand.vmem [shape: f32[1,2], index: 2, kind: input, shape index: {}]
  %s3 = inlined_call_operand.vmem [shape: f32[32,2], index: 3, kind: input, shape index: {}]
  %s4 = inlined_call_operand.vmem [shape: f32[32,1], index: 4, kind: input, shape index: {}]
  %s5 = inlined_call_operand.vmem [shape: f32[32,1], index: 5, kind: input, shape index: {}]
  %s6 = inlined_call_operand.vmem [shape: f32[2,32,256], index: 6, kind: output, shape index: {}]
  %s7 = sld [smem:[#allocation0]]
  $region34: #{scse_block.1} parent=0
    _
  %s9 = ssub.s32 1, %s7
  %s10 = scalar_select 0, %s9, %s7
  // Predicated region
  $region2: #{scse_block.1} parent=0 // pred_check
    _
  $region3: #{scse_block.1} parent=0 // pred_check_branch
    %12 = sbr.rel (0) target = $region5
  $region4: #{scse_block.1} parent=0 // pred_region
    _
  $region5: #{scse_block.1} parent=0 // pred_fallthru
    _
  // Predicated region
  $region6: #{scse_block.1} parent=0 // pred_check
    _
  $region7: #{scse_block.1} parent=0 // pred_check_branch
    %14 = sbr.rel (0) target = $region9
  $region8: #{scse_block.1} parent=0 // pred_region
    _
  $region9: #{scse_block.1} parent=0 // pred_fallthru
    _
  // Predicated region
  $region10: #{scse_block.1} parent=0 // pred_check
    _
  $region11: #{scse_block.1} parent=0 // pred_check_branch
    %16 = sbr.rel (0) target = $region13
  $region12: #{scse_block.1} parent=0 // pred_region
    _
  $region13: #{scse_block.1} parent=0 // pred_fallthru
    _
  // Predicated region
  $region14: #{scse_block.1} parent=0 // pred_check
    _
  $region15: #{scse_block.1} parent=0 // pred_check_branch
    %18 = sbr.rel (0) target = $region17
  $region16: #{scse_block.1} parent=0 // pred_region
    _
  $region17: #{scse_block.1} parent=0 // pred_fallthru
    _
  // Predicated region
  $region18: #{scse_block.1} parent=0 // pred_check
    _
  $region19: #{scse_block.1} parent=0 // pred_check_branch
    %20 = sbr.rel (0) target = $region21
  $region20: #{scse_block.1} parent=0 // pred_region
    _
  $region21: #{scse_block.1} parent=0 // pred_fallthru
    _
  // Predicated region
  $region22: #{scse_block.1} parent=0 // pred_check
    _
  $region23: #{scse_block.1} parent=0 // pred_check_branch
    %22 = sbr.rel (0) target = $region25
  $region24: #{scse_block.1} parent=0 // pred_region
    _
  $region25: #{scse_block.1} parent=0 // pred_fallthru
    _
  %v23 = vld [vmem:[%s0] sm:$0xff]
  %v24 = vld [vmem:[%s0 + $0x8] sm:$0xff]
  %v25 = vld [vmem:[%s0 + $0x10] sm:$0xff]
  %v26 = vld [vmem:[%s0 + $0x18] sm:$0xff]
  %v27 = vld [vmem:[%s0 + $0x20] sm:$0xff]
  %v28 = vld [vmem:[%s0 + $0x28] sm:$0xff]
  %v29 = vld [vmem:[%s0 + $0x30] sm:$0xff]
  %v30 = vld [vmem:[%s0 + $0x38] sm:$0xff]
  %v31 = vld [vmem:[%s0 + $0x40] sm:$0xff]
  %v32 = vld [vmem:[%s0 + $0x48] sm:$0xff]
  %v33 = vld [vmem:[%s0 + $0x50] sm:$0xff]
  %v34 = vld [vmem:[%s0 + $0x58] sm:$0xff]
  %v35 = vld [vmem:[%s0 + $0x60] sm:$0xff]
  %v36 = vld [vmem:[%s0 + $0x68] sm:$0xff]
  %v37 = vld [vmem:[%s0 + $0x70] sm:$0xff]
  %v38 = vld [vmem:[%s0 + $0x78] sm:$0xff]
  %v39 = vadd.f32 %v23, %v24
  %40 = vadd.xlane.f32.xlu0 %v39
  %v41 = vpop.xlane.xlu0 %40
  %v42 = vadd.f32 %v25, %v26
  %43 = vadd.xlane.f32.xlu0 %v42
  %v44 = vpop.xlane.xlu0 %43
  %v45 = vadd.f32 %v27, %v28
  %46 = vadd.xlane.f32.xlu0 %v45
  %v47 = vpop.xlane.xlu0 %46
  %v48 = vadd.f32 %v29, %v30
  %49 = vadd.xlane.f32.xlu0 %v48
  %v50 = vpop.xlane.xlu0 %49
  %v51 = vadd.f32 %v31, %v32
  %52 = vadd.xlane.f32.xlu0 %v51
  %v53 = vpop.xlane.xlu0 %52
  %v54 = vadd.f32 %v33, %v34
  %55 = vadd.xlane.f32.xlu0 %v54
  %v56 = vpop.xlane.xlu0 %55
  %v57 = vadd.f32 %v35, %v36
  %58 = vadd.xlane.f32.xlu0 %v57
  %v59 = vpop.xlane.xlu0 %58
  %v60 = vadd.f32 %v37, %v38
  %61 = vadd.xlane.f32.xlu0 %v60
  %v62 = vpop.xlane.xlu0 %61
  %v63 = vrcp.pop 256.0
  %v64 = vmul.f32 %v41, %v63
  %v65 = vmul.f32 %v44, %v63
  %v66 = vmul.f32 %v47, %v63
  %v67 = vmul.f32 %v50, %v63
  %v68 = vmul.f32 %v53, %v63
  %v69 = vmul.f32 %v56, %v63
  %v70 = vmul.f32 %v59, %v63
  %v71 = vmul.f32 %v62, %v63
  %v72 = vld [vmem:[%s1] sm:$0xff]
  %v73 = vld [vmem:[%s1 + $0x8] sm:$0xff]
  %v74 = vld [vmem:[%s1 + $0x10] sm:$0xff]
  %v75 = vld [vmem:[%s1 + $0x18] sm:$0xff]
  %v76 = vmul.f32 %v64, %v72
  %v77 = vmul.f32 %v65, %v73
  %v78 = vmul.f32 %v66, %v74
  %v79 = vmul.f32 %v67, %v75
  %v80 = vmul.f32 %v68, %v72
  %v81 = vmul.f32 %v69, %v73
  %v82 = vmul.f32 %v70, %v74
  %v83 = vmul.f32 %v71, %v75
  %vm84 = vcmask 15360
  %v85 = vsel %vm84, %v76, 0.0
  %v86 = vsel %vm84, %v77, 0.0
  %v87 = vadd.f32 %v85, %v86
  %v88 = vsel %vm84, %v78, 0.0
  %v89 = vadd.f32 %v87, %v88
  %v90 = vsel %vm84, %v79, 0.0
  %v91 = vadd.f32 %v89, %v90
  %v92 = vrot.slane %v91, 4
  %v93 = vadd.f32 %v91, %v92
  %v94 = vrot.slane %v93, 2
  %v95 = vadd.f32 %v93, %v94
  %v96 = vrot.slane %v95, 1
  %v97 = vadd.f32 %v95, %v96
  %v98 = vsel %vm84, %v80, 0.0
  %v99 = vsel %vm84, %v81, 0.0
  %v100 = vadd.f32 %v98, %v99
  %v101 = vsel %vm84, %v82, 0.0
  %v102 = vadd.f32 %v100, %v101
  %v103 = vsel %vm84, %v83, 0.0
  %v104 = vadd.f32 %v102, %v103
  %v105 = vrot.slane %v104, 4
  %v106 = vadd.f32 %v104, %v105
  %v107 = vrot.slane %v106, 2
  %v108 = vadd.f32 %v106, %v107
  %v109 = vrot.slane %v108, 1
  %v110 = vadd.f32 %v108, %v109
  %v111 = vld [vmem:[%s2] sm:$0x1]
  %v113 = vlaneseq
  %v114 = vshrl.u32 %v113, 7
  %v115 = vsub.s32 0, %v114
  %v116 = vrot.slane %v111, %v115
  %v118 = vadd.f32 %v97, %v116
  %v119 = vadd.f32 %v110, %v116
  %v120 = vmax.f32 %v118, 0.0
  %v121 = vmax.f32 %v119, 0.0
  %v122 = vld [vmem:[%s3] sm:$0xff]
  %v123 = vld [vmem:[%s3 + $0x8] sm:$0xff]
  %v124 = vld [vmem:[%s3 + $0x10] sm:$0xff]
  %v125 = vld [vmem:[%s3 + $0x18] sm:$0xff]
  %v126 = vlaneseq
  %v127 = vshrl.u32 %v126, 7
  %v128 = vsub.s32 0, %v127
  %v129 = vrot.slane %v120, %v128
  %v130 = vlaneseq
  %v131 = vshrl.u32 %v130, 7
  %v132 = vsub.s32 0, %v131
  %v133 = vrot.slane %v121, %v132
  %v134 = vmul.f32 %v122, %v129
  %v135 = vmul.f32 %v123, %v129
  %v136 = vmul.f32 %v124, %v129
  %v137 = vmul.f32 %v125, %v129
  %v138 = vmul.f32 %v122, %v133
  %v139 = vmul.f32 %v123, %v133
  %v140 = vmul.f32 %v124, %v133
  %v141 = vmul.f32 %v125, %v133
  %v142 = vsel %vm84, %v134, 0.0
  %143 = vadd.xlane.f32.xlu0 %v142
  %v144 = vpop.xlane.xlu0 %143
  %v145 = vsel %vm84, %v135, 0.0
  %146 = vadd.xlane.f32.xlu0 %v145
  %v147 = vpop.xlane.xlu0 %146
  %v148 = vsel %vm84, %v136, 0.0
  %149 = vadd.xlane.f32.xlu0 %v148
  %v150 = vpop.xlane.xlu0 %149
  %v151 = vsel %vm84, %v137, 0.0
  %152 = vadd.xlane.f32.xlu0 %v151
  %v153 = vpop.xlane.xlu0 %152
  %v154 = vsel %vm84, %v138, 0.0
  %155 = vadd.xlane.f32.xlu0 %v154
  %v156 = vpop.xlane.xlu0 %155
  %v157 = vsel %vm84, %v139, 0.0
  %158 = vadd.xlane.f32.xlu0 %v157
  %v159 = vpop.xlane.xlu0 %158
  %v160 = vsel %vm84, %v140, 0.0
  %161 = vadd.xlane.f32.xlu0 %v160
  %v162 = vpop.xlane.xlu0 %161
  %v163 = vsel %vm84, %v141, 0.0
  %164 = vadd.xlane.f32.xlu0 %v163
  %v165 = vpop.xlane.xlu0 %164
  %v166 = vld [vmem:[%s4] sm:$0xff]
  %v167 = vld [vmem:[%s4 + $0x8] sm:$0xff]
  %v168 = vld [vmem:[%s4 + $0x10] sm:$0xff]
  %v169 = vld [vmem:[%s4 + $0x18] sm:$0xff]
  %v170 = vadd.f32 %v144, %v166
  %v171 = vadd.f32 %v147, %v167
  %v172 = vadd.f32 %v150, %v168
  %v173 = vadd.f32 %v153, %v169
  %v174 = vadd.f32 %v156, %v166
  %v175 = vadd.f32 %v159, %v167
  %v176 = vadd.f32 %v162, %v168
  %v177 = vadd.f32 %v165, %v169
  %v178 = vxor.u32 %v170, 2147483648
  %v179 = vxor.u32 %v171, 2147483648
  %v180 = vxor.u32 %v172, 2147483648
  %v181 = vxor.u32 %v173, 2147483648
  %v182 = vxor.u32 %v174, 2147483648
  %v183 = vxor.u32 %v175, 2147483648
  %v184 = vxor.u32 %v176, 2147483648
  %v185 = vxor.u32 %v177, 2147483648
  %v186 = vmul.f32 %v178, 1.442695
  %v187 = vpow.pop %v186
  %v188 = vmul.f32 %v179, 1.442695
  %v189 = vpow.pop %v188
  %v190 = vmul.f32 %v180, 1.442695
  %v191 = vpow.pop %v190
  %v192 = vmul.f32 %v181, 1.442695
  %v193 = vpow.pop %v192
  %v194 = vmul.f32 %v182, 1.442695
  %v195 = vpow.pop %v194
  %v196 = vmul.f32 %v183, 1.442695
  %v197 = vpow.pop %v196
  %v198 = vmul.f32 %v184, 1.442695
  %v199 = vpow.pop %v198
  %v200 = vmul.f32 %v185, 1.442695
  %v201 = vpow.pop %v200
  %v202 = vadd.f32 %v187, 1.0
  %v203 = vadd.f32 %v189, 1.0
  %v204 = vadd.f32 %v191, 1.0
  %v205 = vadd.f32 %v193, 1.0
  %v206 = vadd.f32 %v195, 1.0
  %v207 = vadd.f32 %v197, 1.0
  %v208 = vadd.f32 %v199, 1.0
  %v209 = vadd.f32 %v201, 1.0
  %v210 = vrcp.pop %v202
  %v211 = vmul.f32 1.0, %v210
  %v212 = vrcp.pop %v203
  %v213 = vmul.f32 1.0, %v212
  %v214 = vrcp.pop %v204
  %v215 = vmul.f32 1.0, %v214
  %v216 = vrcp.pop %v205
  %v217 = vmul.f32 1.0, %v216
  %v218 = vrcp.pop %v206
  %v219 = vmul.f32 1.0, %v218
  %v220 = vrcp.pop %v207
  %v221 = vmul.f32 1.0, %v220
  %v222 = vrcp.pop %v208
  %v223 = vmul.f32 1.0, %v222
  %v224 = vrcp.pop %v209
  %v225 = vmul.f32 1.0, %v224
  %v226 = vmul.f32 %v211, 1.442695
  %v227 = vpow.pop %v226
  %v228 = vmul.f32 %v213, 1.442695
  %v229 = vpow.pop %v228
  %v230 = vmul.f32 %v215, 1.442695
  %v231 = vpow.pop %v230
  %v232 = vmul.f32 %v217, 1.442695
  %v233 = vpow.pop %v232
  %v234 = vmul.f32 %v219, 1.442695
  %v235 = vpow.pop %v234
  %v236 = vmul.f32 %v221, 1.442695
  %v237 = vpow.pop %v236
  %v238 = vmul.f32 %v223, 1.442695
  %v239 = vpow.pop %v238
  %v240 = vmul.f32 %v225, 1.442695
  %v241 = vpow.pop %v240
  %v242 = vld [vmem:[%s5] sm:$0xff]
  %v243 = vld [vmem:[%s5 + $0x8] sm:$0xff]
  %v244 = vld [vmem:[%s5 + $0x10] sm:$0xff]
  %v245 = vld [vmem:[%s5 + $0x18] sm:$0xff]
  %247 = vset.pattern.permute.xlu0 0
  %248 = vperm.xlu0 %247, %v242
  %v249 = vpop.permute.xlu0 %248
  %252 = vset.pattern.permute.xlu0 0
  %253 = vperm.xlu0 %252, %v243
  %v254 = vpop.permute.xlu0 %253
  %257 = vset.pattern.permute.xlu0 0
  %258 = vperm.xlu0 %257, %v244
  %v259 = vpop.permute.xlu0 %258
  %262 = vset.pattern.permute.xlu0 0
  %263 = vperm.xlu0 %262, %v245
  %v264 = vpop.permute.xlu0 %263
  %v266 = vmul.f32 %v23, %v249
  %v267 = vmul.f32 %v24, %v249
  %v268 = vmul.f32 %v25, %v254
  %v269 = vmul.f32 %v26, %v254
  %v270 = vmul.f32 %v27, %v259
  %v271 = vmul.f32 %v28, %v259
  %v272 = vmul.f32 %v29, %v264
  %v273 = vmul.f32 %v30, %v264
  %v274 = vmul.f32 %v31, %v249
  %v275 = vmul.f32 %v32, %v249
  %v276 = vmul.f32 %v33, %v254
  %v277 = vmul.f32 %v34, %v254
  %v278 = vmul.f32 %v35, %v259
  %v279 = vmul.f32 %v36, %v259
  %v280 = vmul.f32 %v37, %v264
  %v281 = vmul.f32 %v38, %v264
  %v282 = vadd.f32 %v266, %v268
  %v283 = vadd.f32 %v282, %v270
  %v284 = vadd.f32 %v283, %v272
  %v285 = vrot.slane %v284, 4
  %v286 = vadd.f32 %v284, %v285
  %v287 = vrot.slane %v286, 2
  %v288 = vadd.f32 %v286, %v287
  %v289 = vrot.slane %v288, 1
  %v290 = vadd.f32 %v288, %v289
  %v291 = vadd.f32 %v267, %v269
  %v292 = vadd.f32 %v291, %v271
  %v293 = vadd.f32 %v292, %v273
  %v294 = vrot.slane %v293, 4
  %v295 = vadd.f32 %v293, %v294
  %v296 = vrot.slane %v295, 2
  %v297 = vadd.f32 %v295, %v296
  %v298 = vrot.slane %v297, 1
  %v299 = vadd.f32 %v297, %v298
  %v300 = vadd.f32 %v274, %v276
  %v301 = vadd.f32 %v300, %v278
  %v302 = vadd.f32 %v301, %v280
  %v303 = vrot.slane %v302, 4
  %v304 = vadd.f32 %v302, %v303
  %v305 = vrot.slane %v304, 2
  %v306 = vadd.f32 %v304, %v305
  %v307 = vrot.slane %v306, 1
  %v308 = vadd.f32 %v306, %v307
  %v309 = vadd.f32 %v275, %v277
  %v310 = vadd.f32 %v309, %v279
  %v311 = vadd.f32 %v310, %v281
  %v312 = vrot.slane %v311, 4
  %v313 = vadd.f32 %v311, %v312
  %v314 = vrot.slane %v313, 2
  %v315 = vadd.f32 %v313, %v314
  %v316 = vrot.slane %v315, 1
  %v317 = vadd.f32 %v315, %v316
  %v318 = vxor.u32 %v290, 2147483648
  %v319 = vxor.u32 %v299, 2147483648
  %v320 = vxor.u32 %v308, 2147483648
  %v321 = vxor.u32 %v317, 2147483648
  %v322 = vmul.f32 %v318, 1.442695
  %v323 = vpow.pop %v322
  %v324 = vmul.f32 %v319, 1.442695
  %v325 = vpow.pop %v324
  %v326 = vmul.f32 %v320, 1.442695
  %v327 = vpow.pop %v326
  %v328 = vmul.f32 %v321, 1.442695
  %v329 = vpow.pop %v328
  %v330 = vadd.f32 %v323, 1.0
  %v331 = vadd.f32 %v325, 1.0
  %v332 = vadd.f32 %v327, 1.0
  %v333 = vadd.f32 %v329, 1.0
  %v334 = vrcp.pop %v330
  %v335 = vmul.f32 1.0, %v334
  %v336 = vrcp.pop %v331
  %v337 = vmul.f32 1.0, %v336
  %v338 = vrcp.pop %v332
  %v339 = vmul.f32 1.0, %v338
  %v340 = vrcp.pop %v333
  %v341 = vmul.f32 1.0, %v340
  %v342 = vmul.f32 %v335, 1.442695
  %v343 = vpow.pop %v342
  %v344 = vmul.f32 %v337, 1.442695
  %v345 = vpow.pop %v344
  %v346 = vmul.f32 %v339, 1.442695
  %v347 = vpow.pop %v346
  %v348 = vmul.f32 %v341, 1.442695
  %v349 = vpow.pop %v348
  %351 = vset.pattern.permute.xlu0 0
  %352 = vperm.xlu0 %351, %v227
  %v353 = vpop.permute.xlu0 %352
  %356 = vset.pattern.permute.xlu0 0
  %357 = vperm.xlu0 %356, %v229
  %v358 = vpop.permute.xlu0 %357
  %361 = vset.pattern.permute.xlu0 0
  %362 = vperm.xlu0 %361, %v231
  %v363 = vpop.permute.xlu0 %362
  %366 = vset.pattern.permute.xlu0 0
  %367 = vperm.xlu0 %366, %v233
  %v368 = vpop.permute.xlu0 %367
  %371 = vset.pattern.permute.xlu0 0
  %372 = vperm.xlu0 %371, %v235
  %v373 = vpop.permute.xlu0 %372
  %376 = vset.pattern.permute.xlu0 0
  %377 = vperm.xlu0 %376, %v237
  %v378 = vpop.permute.xlu0 %377
  %381 = vset.pattern.permute.xlu0 0
  %382 = vperm.xlu0 %381, %v239
  %v383 = vpop.permute.xlu0 %382
  %386 = vset.pattern.permute.xlu0 0
  %387 = vperm.xlu0 %386, %v241
  %v388 = vpop.permute.xlu0 %387
  %v390 = vmul.f32 %v23, %v353
  %v391 = vmul.f32 %v24, %v353
  %v392 = vmul.f32 %v25, %v358
  %v393 = vmul.f32 %v26, %v358
  %v394 = vmul.f32 %v27, %v363
  %v395 = vmul.f32 %v28, %v363
  %v396 = vmul.f32 %v29, %v368
  %v397 = vmul.f32 %v30, %v368
  %v398 = vmul.f32 %v31, %v373
  %v399 = vmul.f32 %v32, %v373
  %v400 = vmul.f32 %v33, %v378
  %v401 = vmul.f32 %v34, %v378
  %v402 = vmul.f32 %v35, %v383
  %v403 = vmul.f32 %v36, %v383
  %v404 = vmul.f32 %v37, %v388
  %v405 = vmul.f32 %v38, %v388
  %v406 = vmul.f32 %v390, %v343
  %v407 = vmul.f32 %v391, %v345
  %v408 = vmul.f32 %v392, %v343
  %v409 = vmul.f32 %v393, %v345
  %v410 = vmul.f32 %v394, %v343
  %v411 = vmul.f32 %v395, %v345
  %v412 = vmul.f32 %v396, %v343
  %v413 = vmul.f32 %v397, %v345
  %v414 = vmul.f32 %v398, %v347
  %v415 = vmul.f32 %v399, %v349
  %v416 = vmul.f32 %v400, %v347
  %v417 = vmul.f32 %v401, %v349
  %v418 = vmul.f32 %v402, %v347
  %v419 = vmul.f32 %v403, %v349
  %v420 = vmul.f32 %v404, %v347
  %v421 = vmul.f32 %v405, %v349
  %422 = vst [vmem:[%s6] sm:$0xff] %v406
  %423 = vst [vmem:[%s6 + $0x8] sm:$0xff] %v407
  %424 = vst [vmem:[%s6 + $0x10] sm:$0xff] %v408
  %425 = vst [vmem:[%s6 + $0x18] sm:$0xff] %v409
  %426 = vst [vmem:[%s6 + $0x20] sm:$0xff] %v410
  %427 = vst [vmem:[%s6 + $0x28] sm:$0xff] %v411
  %428 = vst [vmem:[%s6 + $0x30] sm:$0xff] %v412
  %429 = vst [vmem:[%s6 + $0x38] sm:$0xff] %v413
  %430 = vst [vmem:[%s6 + $0x40] sm:$0xff] %v414
  %431 = vst [vmem:[%s6 + $0x48] sm:$0xff] %v415
  %432 = vst [vmem:[%s6 + $0x50] sm:$0xff] %v416
  %433 = vst [vmem:[%s6 + $0x58] sm:$0xff] %v417
  %434 = vst [vmem:[%s6 + $0x60] sm:$0xff] %v418
  %435 = vst [vmem:[%s6 + $0x68] sm:$0xff] %v419
  %436 = vst [vmem:[%s6 + $0x70] sm:$0xff] %v420
  %437 = vst [vmem:[%s6 + $0x78] sm:$0xff] %v421
  // Predicated region
  $region26: #{scse_block.1} parent=0 // pred_check
    _
  $region27: #{scse_block.1} parent=0 // pred_check_branch
    %439 = sbr.rel (0) target = $region29
  $region28: #{scse_block.1} parent=0 // pred_region
    _
  $region29: #{scse_block.1} parent=0 // pred_fallthru
    _
  // Predicated region
  $region30: #{scse_block.1} parent=0 // pred_check
    _
  $region31: #{scse_block.1} parent=0 // pred_check_branch
    %441 = sbr.rel (0) target = $region33
  $region32: #{scse_block.1} parent=0 // pred_region
    _
  $region33: #{scse_block.1} parent=0 // pred_fallthru
    _

</llo_original>
